<compile_context>
chip_gen: v6e
topology: v6e:2x2x1
jax: 0.10.0
libtpu: 0.0.40
codegen_flags: <defaults>
</compile_context>

<pallas_src>
import functools

import jax
import jax.numpy as jnp
from jax.experimental import pallas as pl
from jax.experimental.pallas import tpu as pltpu

_EPS = 1e-5


def _recurrent_kernel(x_ref, band_ref, pm_ref, gl_ref, bl_ref, out_ref, *,
                      t, rows_per_image):
    # x_ref:    (R, L)     R = B*H/2 packed rows, L = 2*W*C lanes (=128 here)
    # band_ref: (3L, L)    stacked banded conv matrices for dr = -1, 0, +1
    # pm_ref:   (L, L)     channel-average + lane-broadcast matrix ( /N )
    # gl_ref:   (1, L)     BatchNorm gamma tiled onto the lane layout
    # bl_ref:   (1, L)     BatchNorm beta tiled onto the lane layout
    # out_ref:  (R, L)
    R, L = x_ref.shape

    # Image-boundary masks for the vertical (packed-row) halos.  Rolls wrap
    # around, so the first/last packed row of every image must be zeroed.
    row = jax.lax.broadcasted_iota(jnp.int32, (R, L), 0)
    top_row = (row % rows_per_image) == 0
    bot_row = (row % rows_per_image) == (rows_per_image - 1)

    # Hoist the constant operands out of the recurrence loop.
    band = band_ref[...]          # (3L, L)
    pm = pm_ref[...]              # (L, L)
    gl = gl_ref[...]              # (1, L)
    bl = bl_ref[...]              # (1, L)

    def conv_bn_relu(inp):        # inp: (R, L) f32 value
        # --- Conv3x3 (pad=1): one K-concatenated banded matmul --------------
        up = jnp.where(top_row, 0.0, pltpu.roll(inp, shift=1, axis=0))      # row r-1
        dn = jnp.where(bot_row, 0.0, pltpu.roll(inp, shift=R - 1, axis=0))  # row r+1
        operand = jnp.concatenate([up, inp, dn], axis=1)                    # (R, 3L)
        acc = jnp.dot(operand, band, preferred_element_type=jnp.float32)    # (R, L)
        # Conv bias omitted: exactly cancelled by BatchNorm's mean subtraction.

        # --- BatchNorm2d (training-mode batch stats, biased var) + ReLU -----
        s1 = jnp.sum(acc, axis=0, keepdims=True)                            # (1, L)
        s2 = jnp.sum(acc * acc, axis=0, keepdims=True)                      # (1, L)
        moments = jnp.dot(jnp.concatenate([s1, s2], axis=0), pm,
                          preferred_element_type=jnp.float32)               # (2, L)
        mean = moments[0:1, :]
        var = jnp.maximum(moments[1:2, :] - mean * mean, 0.0)
        scale = jax.lax.rsqrt(var + _EPS) * gl
        return jnp.maximum((acc - mean) * scale + bl, 0.0)

    x = x_ref[...]
    x1 = None
    for i in range(t):                      # static Python loop (t is small)
        if i == 0:
            x1 = conv_bn_relu(x)
        x1 = conv_bn_relu(x + x1)
    out_ref[...] = x1


def _build_packed_band(w, W, C):
    """Stacked banded conv matrices for the 2-row-per-sublane packed layout.

    Lane index inside a packed row is  p*W*C + w*C + c  with p in {0, 1}
    (p = h % 2).  Output packed row r depends on input packed rows r-1, r, r+1
    (dr = -1, 0, +1); the returned matrix is concat([B_-1, B_0, B_+1], axis=0)
    so a single matmul against the K-concatenated [up, x, dn] slabs computes
    the full 3x3 convolution.  Horizontal zero padding is implicit (missing
    band entries); w is (3, 3, Cin, Cout) (HWIO)."""
    WC = W * C
    wf = w.astype(jnp.float32)

    def wc_block(dy):  # (WC, WC) block for a given vertical tap dy (or zeros)
        if dy < 0 or dy > 2:
            return jnp.zeros((WC, WC), jnp.float32)
        blk = jnp.zeros((WC, WC), jnp.float32)
        for dx in range(3):
            # S[w_in, w_out] = 1 iff w_in = w_out + dx - 1  (horizontal tap)
            shift = jnp.eye(W, k=1 - dx, dtype=jnp.float32)
            blk = blk + jnp.kron(shift, wf[dy, dx])
        return blk

    mats = []
    for dr in (-1, 0, 1):
        rows = []
        for p_in in range(2):
            cols = []
            for p_out in range(2):
                dy = 2 * dr + p_in - p_out + 1   # vertical tap for this pairing
                cols.append(wc_block(dy))
            rows.append(jnp.concatenate(cols, axis=1))    # (WC, 2WC)
        mats.append(jnp.concatenate(rows, axis=0))        # (2WC, 2WC)
    return jnp.concatenate(mats, axis=0)                  # (6WC, 2WC) = (3L, L)


def recurrent_block(x_nchw, w, b, gamma, beta, t=2):
    """Pallas implementation of Recurrent_block.forward (NCHW in/out).

    w: (3, 3, Cin, Cout) conv weight (HWIO).  b is accepted for interface
    parity but unused: training-mode BatchNorm cancels a per-channel bias."""
    del b  # mathematically a no-op under training-mode (batch-stats) BatchNorm
    B, C, H, W = x_nchw.shape
    if H % 2 != 0:
        raise ValueError("row packing requires an even H")
    if t < 1:
        raise ValueError("t must be >= 1 (matches the PyTorch module)")
    H2 = H // 2
    L = 2 * W * C
    R = B * H2
    n = float(B * H * W)

    # NCHW -> packed lane-dense layout (B*H/2, 2*W*C).
    x = jnp.transpose(x_nchw, (0, 2, 3, 1)).astype(jnp.float32)   # (B,H,W,C)
    x = x.reshape(B, H2, 2, W, C).reshape(R, L)

    band = _build_packed_band(w, W, C)                            # (3L, L)
    # Channel-average + broadcast matrix: pm[i, j] = (i%C == j%C) / N.
    pm = (jnp.kron(jnp.ones((2 * W, 2 * W), jnp.float32),
                   jnp.eye(C, dtype=jnp.float32)) / n)            # (L, L)
    gl = jnp.tile(gamma.astype(jnp.float32), 2 * W).reshape(1, L)
    bl = jnp.tile(beta.astype(jnp.float32), 2 * W).reshape(1, L)

    vmem = pl.BlockSpec(memory_space=pltpu.MemorySpace.VMEM)
    out = pl.pallas_call(
        functools.partial(_recurrent_kernel, t=t, rows_per_image=H2),
        out_shape=jax.ShapeDtypeStruct((R, L), jnp.float32),
        in_specs=[vmem, vmem, vmem, vmem, vmem],
        out_specs=vmem,
        compiler_params=pltpu.CompilerParams(
            vmem_limit_bytes=32 * 1024 * 1024),
    )(x, band, pm, gl, bl)

    # packed (B*H/2, 2*W*C) -> NCHW
    out = out.reshape(B, H2, 2, W, C)
    return jnp.transpose(out, (0, 4, 1, 2, 3)).reshape(B, C, H, W)


# ------------------------- pure-JAX reference ------------------------------
def _ref_block(x_nchw, w, b, gamma, beta):
    w_oihw = jnp.transpose(w, (3, 2, 0, 1))  # (3,3,Cin,Cout) -> (O,I,H,W)
    y = jax.lax.conv_general_dilated(
        x_nchw, w_oihw, (1, 1), "SAME",
        dimension_numbers=("NCHW", "OIHW", "NCHW"),
        precision=jax.lax.Precision.HIGHEST)
    y = y + b[None, :, None, None]
    mean = jnp.mean(y, axis=(0, 2, 3), keepdims=True)
    var = jnp.mean((y - mean) ** 2, axis=(0, 2, 3), keepdims=True)
    yhat = (y - mean) * jax.lax.rsqrt(var + _EPS)
    return jnp.maximum(yhat * gamma[None, :, None, None]
                       + beta[None, :, None, None], 0.0)


def _ref_recurrent_block(x, w, b, gamma, beta, t=2):
    x1 = None
    for i in range(t):
        if i == 0:
            x1 = _ref_block(x, w, b, gamma, beta)
        x1 = _ref_block(x + x1, w, b, gamma, beta)
    return x1


if __name__ == "__main__":
    B, C, H, W = 2, 4, 16, 16
    t = 2

    key = jax.random.PRNGKey(0)
    kx, kw, kb, kg, kbeta = jax.random.split(key, 5)

    x = jax.random.normal(kx, (B, C, H, W), jnp.float32)
    w = jax.random.normal(kw, (3, 3, C, C), jnp.float32) * 0.1   # HWIO conv weight
    b = jax.random.normal(kb, (C,), jnp.float32) * 0.1
    gamma = 1.0 + 0.1 * jax.random.normal(kg, (C,), jnp.float32)
    beta = 0.1 * jax.random.normal(kbeta, (C,), jnp.float32)

    out = recurrent_block(x, w, b, gamma, beta, t=t)
    out = jax.block_until_ready(out)

    ref = _ref_recurrent_block(x, w, b, gamma, beta, t=t)
    assert out.shape == (B, C, H, W)
    assert jnp.allclose(out, ref, atol=1e-4, rtol=1e-4), "mismatch vs reference"

    print("KERNEL_OK")
</pallas_src>

<mosaic_0001>
module attributes {stable_mosaic.version = 11 : i64} {
  func.func @_recurrent_kernel(%arg0: memref<16x128xf32, #tpu.memory_space<vmem>>, %arg1: memref<384x128xf32, #tpu.memory_space<vmem>>, %arg2: memref<128x128xf32, #tpu.memory_space<vmem>>, %arg3: memref<1x128xf32, #tpu.memory_space<vmem>>, %arg4: memref<1x128xf32, #tpu.memory_space<vmem>>, %arg5: memref<16x128xf32, #tpu.memory_space<vmem>>) attributes {dimension_semantics = [], scalar_prefetch = 0 : i64, scratch_operands = 0 : i64, tpu.core_type = #tpu.core_type<tc>} {
    %0 = tpu.iota {dimensions = array<i32: 0>} : vector<16x128xi32>
    %c8_i32 = arith.constant 8 : i32
    %c0_i32 = arith.constant 0 : i32
    %1 = arith.cmpi eq, %c8_i32, %c0_i32 : i32
    %c1_i32 = arith.constant 1 : i32
    %2 = arith.select %1, %c1_i32, %c8_i32 : i32
    %3 = vector.broadcast %2 : i32 to vector<16x128xi32>
    %4 = arith.remsi %0, %3 : vector<16x128xi32>
    %c0_i32_0 = arith.constant 0 : i32
    %5 = vector.broadcast %c0_i32_0 : i32 to vector<16x128xi32>
    %6 = arith.cmpi ne, %4, %5 : vector<16x128xi32>
    %c0_i32_1 = arith.constant 0 : i32
    %7 = vector.broadcast %c0_i32_1 : i32 to vector<16x128xi32>
    %8 = arith.cmpi slt, %4, %7 : vector<16x128xi32>
    %c0_i32_2 = arith.constant 0 : i32
    %9 = arith.cmpi slt, %2, %c0_i32_2 : i32
    %10 = vector.broadcast %9 : i1 to vector<16x128xi1>
    %11 = vector.broadcast %10 : vector<16x128xi1> to vector<16x128xi1>
    %12 = arith.xori %8, %11 : vector<16x128xi1>
    %13 = arith.andi %12, %6 : vector<16x128xi1>
    %14 = vector.broadcast %2 : i32 to vector<16x128xi32>
    %15 = arith.addi %4, %14 : vector<16x128xi32>
    %16 = arith.select %13, %15, %4 : vector<16x128xi1>, vector<16x128xi32>
    %c0_i32_3 = arith.constant 0 : i32
    %17 = vector.broadcast %c0_i32_3 : i32 to vector<16x128xi32>
    %18 = arith.cmpi eq, %16, %17 : vector<16x128xi32>
    %c8_i32_4 = arith.constant 8 : i32
    %c0_i32_5 = arith.constant 0 : i32
    %19 = arith.cmpi eq, %c8_i32_4, %c0_i32_5 : i32
    %c1_i32_6 = arith.constant 1 : i32
    %20 = arith.select %19, %c1_i32_6, %c8_i32_4 : i32
    %21 = vector.broadcast %20 : i32 to vector<16x128xi32>
    %22 = arith.remsi %0, %21 : vector<16x128xi32>
    %c0_i32_7 = arith.constant 0 : i32
    %23 = vector.broadcast %c0_i32_7 : i32 to vector<16x128xi32>
    %24 = arith.cmpi ne, %22, %23 : vector<16x128xi32>
    %c0_i32_8 = arith.constant 0 : i32
    %25 = vector.broadcast %c0_i32_8 : i32 to vector<16x128xi32>
    %26 = arith.cmpi slt, %22, %25 : vector<16x128xi32>
    %c0_i32_9 = arith.constant 0 : i32
    %27 = arith.cmpi slt, %20, %c0_i32_9 : i32
    %28 = vector.broadcast %27 : i1 to vector<16x128xi1>
    %29 = vector.broadcast %28 : vector<16x128xi1> to vector<16x128xi1>
    %30 = arith.xori %26, %29 : vector<16x128xi1>
    %31 = arith.andi %30, %24 : vector<16x128xi1>
    %32 = vector.broadcast %20 : i32 to vector<16x128xi32>
    %33 = arith.addi %22, %32 : vector<16x128xi32>
    %34 = arith.select %31, %33, %22 : vector<16x128xi1>, vector<16x128xi32>
    %c7_i32 = arith.constant 7 : i32
    %35 = vector.broadcast %c7_i32 : i32 to vector<16x128xi32>
    %36 = arith.cmpi eq, %34, %35 : vector<16x128xi32>
    %c0 = arith.constant 0 : index
    %c0_10 = arith.constant 0 : index
    %37 = vector.load %arg1[%c0, %c0_10] : memref<384x128xf32, #tpu.memory_space<vmem>>, vector<384x128xf32>
    %c0_11 = arith.constant 0 : index
    %c0_12 = arith.constant 0 : index
    %38 = vector.load %arg2[%c0_11, %c0_12] : memref<128x128xf32, #tpu.memory_space<vmem>>, vector<128x128xf32>
    %c0_13 = arith.constant 0 : index
    %c0_14 = arith.constant 0 : index
    %39 = vector.load %arg3[%c0_13, %c0_14] : memref<1x128xf32, #tpu.memory_space<vmem>>, vector<1x128xf32>
    %c0_15 = arith.constant 0 : index
    %c0_16 = arith.constant 0 : index
    %40 = vector.load %arg4[%c0_15, %c0_16] : memref<1x128xf32, #tpu.memory_space<vmem>>, vector<1x128xf32>
    %c0_17 = arith.constant 0 : index
    %c0_18 = arith.constant 0 : index
    %41 = vector.load %arg0[%c0_17, %c0_18] : memref<16x128xf32, #tpu.memory_space<vmem>>, vector<16x128xf32>
    %c1_i32_19 = arith.constant 1 : i32
    %42 = tpu.dynamic_rotate %41 by %c1_i32_19 dim 0 : vector<16x128xf32>, i32 -> vector<16x128xf32>
    %cst = arith.constant 0.000000e+00 : f32
    %43 = vector.broadcast %cst : f32 to vector<16x128xf32>
    %44 = arith.select %18, %43, %42 : vector<16x128xi1>, vector<16x128xf32>
    %c15_i32 = arith.constant 15 : i32
    %45 = tpu.dynamic_rotate %41 by %c15_i32 dim 0 : vector<16x128xf32>, i32 -> vector<16x128xf32>
    %cst_20 = arith.constant 0.000000e+00 : f32
    %46 = vector.broadcast %cst_20 : f32 to vector<16x128xf32>
    %47 = arith.select %36, %46, %45 : vector<16x128xi1>, vector<16x128xf32>
    %48 = tpu.concatenate %44, %41, %47 in 1 : vector<16x128xf32>, vector<16x128xf32>, vector<16x128xf32> -> vector<16x384xf32>
    %cst_21 = arith.constant dense<0.000000e+00> : vector<16x128xf32>
    %49 = tpu.matmul %48, %37, %cst_21 {dimension_numbers = #tpu.dot_dimension_numbers<[1], [0], [0], [1], [0, 0, 1, 1], [], []>} : vector<16x384xf32>, vector<384x128xf32>, vector<16x128xf32> -> vector<16x128xf32>
    %cst_22 = arith.constant dense<0.000000e+00> : vector<128xf32>
    %50 = vector.multi_reduction <add>, %49, %cst_22 [0] : vector<16x128xf32> to vector<128xf32>
    %51 = vector.shape_cast %50 : vector<128xf32> to vector<1x128xf32>
    %52 = arith.mulf %49, %49 : vector<16x128xf32>
    %cst_23 = arith.constant dense<0.000000e+00> : vector<128xf32>
    %53 = vector.multi_reduction <add>, %52, %cst_23 [0] : vector<16x128xf32> to vector<128xf32>
    %54 = vector.shape_cast %53 : vector<128xf32> to vector<1x128xf32>
    %55 = tpu.concatenate %51, %54 in 0 : vector<1x128xf32>, vector<1x128xf32> -> vector<2x128xf32>
    %cst_24 = arith.constant dense<0.000000e+00> : vector<2x128xf32>
    %56 = tpu.matmul %55, %38, %cst_24 {dimension_numbers = #tpu.dot_dimension_numbers<[1], [0], [0], [1], [0, 0, 1, 1], [], []>} : vector<2x128xf32>, vector<128x128xf32>, vector<2x128xf32> -> vector<2x128xf32>
    %57 = vector.extract_strided_slice %56 {offsets = [0, 0], sizes = [1, 128], strides = [1, 1]} : vector<2x128xf32> to vector<1x128xf32>
    %58 = vector.extract_strided_slice %56 {offsets = [1, 0], sizes = [1, 128], strides = [1, 1]} : vector<2x128xf32> to vector<1x128xf32>
    %59 = arith.mulf %57, %57 : vector<1x128xf32>
    %60 = arith.subf %58, %59 : vector<1x128xf32>
    %cst_25 = arith.constant 0.000000e+00 : f32
    %61 = vector.broadcast %cst_25 : f32 to vector<1x128xf32>
    %62 = arith.maximumf %60, %61 : vector<1x128xf32>
    %cst_26 = arith.constant 9.99999974E-6 : f32
    %63 = vector.broadcast %cst_26 : f32 to vector<1x128xf32>
    %64 = arith.addf %62, %63 : vector<1x128xf32>
    %65 = math.rsqrt %64 : vector<1x128xf32>
    %66 = arith.mulf %65, %39 : vector<1x128xf32>
    %67 = vector.broadcast %57 : vector<1x128xf32> to vector<16x128xf32>
    %68 = arith.subf %49, %67 : vector<16x128xf32>
    %69 = vector.broadcast %66 : vector<1x128xf32> to vector<16x128xf32>
    %70 = arith.mulf %68, %69 : vector<16x128xf32>
    %71 = vector.broadcast %40 : vector<1x128xf32> to vector<16x128xf32>
    %72 = arith.addf %70, %71 : vector<16x128xf32>
    %cst_27 = arith.constant 0.000000e+00 : f32
    %73 = vector.broadcast %cst_27 : f32 to vector<16x128xf32>
    %74 = arith.maximumf %72, %73 : vector<16x128xf32>
    %75 = arith.addf %41, %74 : vector<16x128xf32>
    %c1_i32_28 = arith.constant 1 : i32
    %76 = tpu.dynamic_rotate %75 by %c1_i32_28 dim 0 : vector<16x128xf32>, i32 -> vector<16x128xf32>
    %cst_29 = arith.constant 0.000000e+00 : f32
    %77 = vector.broadcast %cst_29 : f32 to vector<16x128xf32>
    %78 = arith.select %18, %77, %76 : vector<16x128xi1>, vector<16x128xf32>
    %c15_i32_30 = arith.constant 15 : i32
    %79 = tpu.dynamic_rotate %75 by %c15_i32_30 dim 0 : vector<16x128xf32>, i32 -> vector<16x128xf32>
    %cst_31 = arith.constant 0.000000e+00 : f32
    %80 = vector.broadcast %cst_31 : f32 to vector<16x128xf32>
    %81 = arith.select %36, %80, %79 : vector<16x128xi1>, vector<16x128xf32>
    %82 = tpu.concatenate %78, %75, %81 in 1 : vector<16x128xf32>, vector<16x128xf32>, vector<16x128xf32> -> vector<16x384xf32>
    %cst_32 = arith.constant dense<0.000000e+00> : vector<16x128xf32>
    %83 = tpu.matmul %82, %37, %cst_32 {dimension_numbers = #tpu.dot_dimension_numbers<[1], [0], [0], [1], [0, 0, 1, 1], [], []>} : vector<16x384xf32>, vector<384x128xf32>, vector<16x128xf32> -> vector<16x128xf32>
    %cst_33 = arith.constant dense<0.000000e+00> : vector<128xf32>
    %84 = vector.multi_reduction <add>, %83, %cst_33 [0] : vector<16x128xf32> to vector<128xf32>
    %85 = vector.shape_cast %84 : vector<128xf32> to vector<1x128xf32>
    %86 = arith.mulf %83, %83 : vector<16x128xf32>
    %cst_34 = arith.constant dense<0.000000e+00> : vector<128xf32>
    %87 = vector.multi_reduction <add>, %86, %cst_34 [0] : vector<16x128xf32> to vector<128xf32>
    %88 = vector.shape_cast %87 : vector<128xf32> to vector<1x128xf32>
    %89 = tpu.concatenate %85, %88 in 0 : vector<1x128xf32>, vector<1x128xf32> -> vector<2x128xf32>
    %cst_35 = arith.constant dense<0.000000e+00> : vector<2x128xf32>
    %90 = tpu.matmul %89, %38, %cst_35 {dimension_numbers = #tpu.dot_dimension_numbers<[1], [0], [0], [1], [0, 0, 1, 1], [], []>} : vector<2x128xf32>, vector<128x128xf32>, vector<2x128xf32> -> vector<2x128xf32>
    %91 = vector.extract_strided_slice %90 {offsets = [0, 0], sizes = [1, 128], strides = [1, 1]} : vector<2x128xf32> to vector<1x128xf32>
    %92 = vector.extract_strided_slice %90 {offsets = [1, 0], sizes = [1, 128], strides = [1, 1]} : vector<2x128xf32> to vector<1x128xf32>
    %93 = arith.mulf %91, %91 : vector<1x128xf32>
    %94 = arith.subf %92, %93 : vector<1x128xf32>
    %cst_36 = arith.constant 0.000000e+00 : f32
    %95 = vector.broadcast %cst_36 : f32 to vector<1x128xf32>
    %96 = arith.maximumf %94, %95 : vector<1x128xf32>
    %cst_37 = arith.constant 9.99999974E-6 : f32
    %97 = vector.broadcast %cst_37 : f32 to vector<1x128xf32>
    %98 = arith.addf %96, %97 : vector<1x128xf32>
    %99 = math.rsqrt %98 : vector<1x128xf32>
    %100 = arith.mulf %99, %39 : vector<1x128xf32>
    %101 = vector.broadcast %91 : vector<1x128xf32> to vector<16x128xf32>
    %102 = arith.subf %83, %101 : vector<16x128xf32>
    %103 = vector.broadcast %100 : vector<1x128xf32> to vector<16x128xf32>
    %104 = arith.mulf %102, %103 : vector<16x128xf32>
    %105 = vector.broadcast %40 : vector<1x128xf32> to vector<16x128xf32>
    %106 = arith.addf %104, %105 : vector<16x128xf32>
    %cst_38 = arith.constant 0.000000e+00 : f32
    %107 = vector.broadcast %cst_38 : f32 to vector<16x128xf32>
    %108 = arith.maximumf %106, %107 : vector<16x128xf32>
    %109 = arith.addf %41, %108 : vector<16x128xf32>
    %c1_i32_39 = arith.constant 1 : i32
    %110 = tpu.dynamic_rotate %109 by %c1_i32_39 dim 0 : vector<16x128xf32>, i32 -> vector<16x128xf32>
    %cst_40 = arith.constant 0.000000e+00 : f32
    %111 = vector.broadcast %cst_40 : f32 to vector<16x128xf32>
    %112 = arith.select %18, %111, %110 : vector<16x128xi1>, vector<16x128xf32>
    %c15_i32_41 = arith.constant 15 : i32
    %113 = tpu.dynamic_rotate %109 by %c15_i32_41 dim 0 : vector<16x128xf32>, i32 -> vector<16x128xf32>
    %cst_42 = arith.constant 0.000000e+00 : f32
    %114 = vector.broadcast %cst_42 : f32 to vector<16x128xf32>
    %115 = arith.select %36, %114, %113 : vector<16x128xi1>, vector<16x128xf32>
    %116 = tpu.concatenate %112, %109, %115 in 1 : vector<16x128xf32>, vector<16x128xf32>, vector<16x128xf32> -> vector<16x384xf32>
    %cst_43 = arith.constant dense<0.000000e+00> : vector<16x128xf32>
    %117 = tpu.matmul %116, %37, %cst_43 {dimension_numbers = #tpu.dot_dimension_numbers<[1], [0], [0], [1], [0, 0, 1, 1], [], []>} : vector<16x384xf32>, vector<384x128xf32>, vector<16x128xf32> -> vector<16x128xf32>
    %cst_44 = arith.constant dense<0.000000e+00> : vector<128xf32>
    %118 = vector.multi_reduction <add>, %117, %cst_44 [0] : vector<16x128xf32> to vector<128xf32>
    %119 = vector.shape_cast %118 : vector<128xf32> to vector<1x128xf32>
    %120 = arith.mulf %117, %117 : vector<16x128xf32>
    %cst_45 = arith.constant dense<0.000000e+00> : vector<128xf32>
    %121 = vector.multi_reduction <add>, %120, %cst_45 [0] : vector<16x128xf32> to vector<128xf32>
    %122 = vector.shape_cast %121 : vector<128xf32> to vector<1x128xf32>
    %123 = tpu.concatenate %119, %122 in 0 : vector<1x128xf32>, vector<1x128xf32> -> vector<2x128xf32>
    %cst_46 = arith.constant dense<0.000000e+00> : vector<2x128xf32>
    %124 = tpu.matmul %123, %38, %cst_46 {dimension_numbers = #tpu.dot_dimension_numbers<[1], [0], [0], [1], [0, 0, 1, 1], [], []>} : vector<2x128xf32>, vector<128x128xf32>, vector<2x128xf32> -> vector<2x128xf32>
    %125 = vector.extract_strided_slice %124 {offsets = [0, 0], sizes = [1, 128], strides = [1, 1]} : vector<2x128xf32> to vector<1x128xf32>
    %126 = vector.extract_strided_slice %124 {offsets = [1, 0], sizes = [1, 128], strides = [1, 1]} : vector<2x128xf32> to vector<1x128xf32>
    %127 = arith.mulf %125, %125 : vector<1x128xf32>
    %128 = arith.subf %126, %127 : vector<1x128xf32>
    %cst_47 = arith.constant 0.000000e+00 : f32
    %129 = vector.broadcast %cst_47 : f32 to vector<1x128xf32>
    %130 = arith.maximumf %128, %129 : vector<1x128xf32>
    %cst_48 = arith.constant 9.99999974E-6 : f32
    %131 = vector.broadcast %cst_48 : f32 to vector<1x128xf32>
    %132 = arith.addf %130, %131 : vector<1x128xf32>
    %133 = math.rsqrt %132 : vector<1x128xf32>
    %134 = arith.mulf %133, %39 : vector<1x128xf32>
    %135 = vector.broadcast %125 : vector<1x128xf32> to vector<16x128xf32>
    %136 = arith.subf %117, %135 : vector<16x128xf32>
    %137 = vector.broadcast %134 : vector<1x128xf32> to vector<16x128xf32>
    %138 = arith.mulf %136, %137 : vector<16x128xf32>
    %139 = vector.broadcast %40 : vector<1x128xf32> to vector<16x128xf32>
    %140 = arith.addf %138, %139 : vector<16x128xf32>
    %cst_49 = arith.constant 0.000000e+00 : f32
    %141 = vector.broadcast %cst_49 : f32 to vector<16x128xf32>
    %142 = arith.maximumf %140, %141 : vector<16x128xf32>
    %c0_50 = arith.constant 0 : index
    %c0_51 = arith.constant 0 : index
    %143 = vector.load %arg5[%c0_50, %c0_51] : memref<16x128xf32, #tpu.memory_space<vmem>>, vector<16x128xf32>
    tpu.vector_store %arg5[%c0_50, %c0_51], %142 {strides = array<i32>} : memref<16x128xf32, #tpu.memory_space<vmem>>, vector<16x128xf32>,
    return
  }
}

</mosaic_0001>

<llo_original>
// kernel: tpu_custom_call.1
$region0: #{tpu_custom_call.1}
  #allocation0 [shape = 'u32[]', space=smem, size = 0x4, offset = 0x4, fixed_abs, tag = 'smem constant byte address 0x4 - core index']
  #allocation1 [shape = 'u32[144,128]{1,0:T(1,128)}', space=vmem, size = 0x12000, scoped, tag = 'internal scratch']
  %s0 = inlined_call_operand.hbm [shape: f32[16,128], index: 0, kind: input, shape index: {}]
  %s1 = inlined_call_operand.hbm [shape: f32[384,128], index: 1, kind: input, shape index: {}]
  %s2 = inlined_call_operand.hbm [shape: f32[128,128], index: 2, kind: input, shape index: {}]
  %s3 = inlined_call_operand.vmem [shape: f32[1,128], index: 3, kind: input, shape index: {}]
  %s4 = inlined_call_operand.vmem [shape: f32[1,128], index: 4, kind: input, shape index: {}]
  %s5 = inlined_call_operand.hbm [shape: f32[16,128], index: 5, kind: output, shape index: {}]
  %s6 = sld [smem:[#allocation0]]
  $region42: #{tpu_custom_call.1} parent=0
    _
  %s8 = ssub.s32 1, %s6
  %s9 = scalar_select 0, %s8, %s6
  $region1: #{tpu_custom_call.1} parent=0
    #allocation2 [shape = 'u8[8192]{0}', space=vmem, size = 0x2000, scoped, tag = 'input window, operand 0, single buffered']
    #allocation3 [shape = 's32[1]{0}', space=sflag, size = 0x4, scoped, tag = 'scoped memory for tpu_custom_call.1']
    #allocation4 [shape = 's32[1]{0}', space=sflag, size = 0x4, scoped, tag = 'scoped memory for tpu_custom_call.1']
    #allocation5 [shape = 'u8[196608]{0}', space=vmem, size = 0x30000, scoped, tag = 'input window, operand 1, single buffered']
    #allocation6 [shape = 's32[1]{0}', space=sflag, size = 0x4, scoped, tag = 'scoped memory for tpu_custom_call.1']
    #allocation7 [shape = 'u8[65536]{0}', space=vmem, size = 0x10000, scoped, tag = 'input window, operand 2, single buffered']
    #allocation8 [shape = 'u8[8192]{0}', space=vmem, size = 0x2000, scoped, tag = 'output window, operand 0, single buffered']
    %10 = vsyncpa [#allocation3], 0
    %11 = vsyncpa [#allocation6], 0
    %12 = vsyncpa [#allocation4], 0
    // Predicated region
    $region2: #{tpu_custom_call.1} parent=1 // pred_check
      _
    $region3: #{tpu_custom_call.1} parent=1 // pred_check_branch
      %14 = sbr.rel (0) target = $region5
    $region4: #{tpu_custom_call.1} parent=1 // pred_region
      %s16 = ssub.s32 256, 256
      %17 = vsyncadd [#allocation3], %s16
      %s18 = sshll.u32 [#allocation2], 4
      %s19 = int_to_ptr.vmem [resolvable:$true] %s18
      %24 = dma.hbm_to_vmem [thread:$0]  %s0, 256, %s19, [#allocation3], 128, 128, 8
    $region5: #{tpu_custom_call.1} parent=1 // pred_fallthru
      _
    // Predicated region
    $region6: #{tpu_custom_call.1} parent=1 // pred_check
      _
    $region7: #{tpu_custom_call.1} parent=1 // pred_check_branch
      %26 = sbr.rel (0) target = $region9
    $region8: #{tpu_custom_call.1} parent=1 // pred_region
      %s28 = ssub.s32 6144, 6144
      %29 = vsyncadd [#allocation6], %s28
      %s30 = sshll.u32 [#allocation5], 4
      %s31 = int_to_ptr.vmem [resolvable:$true] %s30
      %36 = dma.hbm_to_vmem [thread:$0]  %s1, 6144, %s31, [#allocation6], 128, 128, 8
    $region9: #{tpu_custom_call.1} parent=1 // pred_fallthru
      _
    // Predicated region
    $region10: #{tpu_custom_call.1} parent=1 // pred_check
      _
    $region11: #{tpu_custom_call.1} parent=1 // pred_check_branch
      %38 = sbr.rel (0) target = $region13
    $region12: #{tpu_custom_call.1} parent=1 // pred_region
      %s40 = ssub.s32 2048, 2048
      %41 = vsyncadd [#allocation6], %s40
      %s42 = sshll.u32 [#allocation7], 4
      %s43 = int_to_ptr.vmem [resolvable:$true] %s42
      %48 = dma.hbm_to_vmem [thread:$0]  %s2, 2048, %s43, [#allocation6], 128, 128, 8
    $region13: #{tpu_custom_call.1} parent=1 // pred_fallthru
      _
    // Predicated region
    $region14: #{tpu_custom_call.1} parent=1 // pred_check
      _
    $region15: #{tpu_custom_call.1} parent=1 // pred_check_branch
      %50 = sbr.rel (0) target = $region17
    $region16: #{tpu_custom_call.1} parent=1 // pred_region
      _
    $region17: #{tpu_custom_call.1} parent=1 // pred_fallthru
      _
    // Predicated region
    $region18: #{tpu_custom_call.1} parent=1 // pred_check
      _
    $region19: #{tpu_custom_call.1} parent=1 // pred_check_branch
      %52 = sbr.rel (0) target = $region21
    $region20: #{tpu_custom_call.1} parent=1 // pred_region
      _
    $region21: #{tpu_custom_call.1} parent=1 // pred_fallthru
      _
    // Predicated region
    $region22: #{tpu_custom_call.1} parent=1 // pred_check
      _
    $region23: #{tpu_custom_call.1} parent=1 // pred_check_branch
      %54 = sbr.rel (0) target = $region25
    $region24: #{tpu_custom_call.1} parent=1 // pred_region
      %55 = dma.done [#allocation3], 256
    $region25: #{tpu_custom_call.1} parent=1 // pred_fallthru
      _
    // Predicated region
    $region26: #{tpu_custom_call.1} parent=1 // pred_check
      _
    $region27: #{tpu_custom_call.1} parent=1 // pred_check_branch
      %57 = sbr.rel (0) target = $region29
    $region28: #{tpu_custom_call.1} parent=1 // pred_region
      %58 = dma.done [#allocation6], 6144
    $region29: #{tpu_custom_call.1} parent=1 // pred_fallthru
      _
    // Predicated region
    $region30: #{tpu_custom_call.1} parent=1 // pred_check
      _
    $region31: #{tpu_custom_call.1} parent=1 // pred_check_branch
      %60 = sbr.rel (0) target = $region33
    $region32: #{tpu_custom_call.1} parent=1 // pred_region
      %61 = dma.done [#allocation6], 2048
    $region33: #{tpu_custom_call.1} parent=1 // pred_fallthru
      _
    %v62 = vlaneseq
    %v63 = vshrl.u32 %v62, 7
    %v64 = vadd.s32 %v63, 8
    %vm65 = vcmp.lt.s32.totalorder %v63, 0
    %v66 = vsub.s32 0, %v63
    %v67 = vsel %vm65, %v66, %v63
    %v68 = vshrl.u32 %v67, 3
    %v69 = vand.u32 %v67, 7
    %v70 = vsub.s32 0, %v69
    %v71 = vsel %vm65, %v70, %v69
    %vm72 = vcmp.lt.s32.totalorder %v64, 0
    %v73 = vsub.s32 0, %v64
    %v74 = vsel %vm72, %v73, %v64
    %v75 = vshrl.u32 %v74, 3
    %v76 = vand.u32 %v74, 7
    %v77 = vsub.s32 0, %v76
    %v78 = vsel %vm72, %v77, %v76
    %vm79 = vcmp.ne.s32.totalorder %v71, 0
    %vm80 = vcmp.ne.s32.totalorder %v78, 0
    %vm81 = vcmp.lt.s32.totalorder %v71, 0
    %vm82 = vcmp.lt.s32.totalorder %v78, 0
    %vm83 = vmand %vm81, %vm79
    %vm84 = vmand %vm82, %vm80
    %v85 = vadd.s32 %v71, 8
    %v86 = vadd.s32 %v78, 8
    %v87 = vsel %vm83, %v85, %v71
    %v88 = vsel %vm84, %v86, %v78
    %vm89 = vcmp.eq.s32.totalorder %v87, 0
    %vm90 = vcmp.eq.s32.totalorder %v88, 0
    %vm91 = vcmp.eq.s32.totalorder %v87, 7
    %vm92 = vcmp.eq.s32.totalorder %v88, 7
    %v93 = vld [vmem:[#allocation5] sm:$0xff]
    %v94 = vld [vmem:[#allocation5 + $0x8] sm:$0xff]
    %v95 = vld [vmem:[#allocation5 + $0x10] sm:$0xff]
    %v96 = vld [vmem:[#allocation5 + $0x18] sm:$0xff]
    %v97 = vld [vmem:[#allocation5 + $0x20] sm:$0xff]
    %v98 = vld [vmem:[#allocation5 + $0x28] sm:$0xff]
    %v99 = vld [vmem:[#allocation5 + $0x30] sm:$0xff]
    %v100 = vld [vmem:[#allocation5 + $0x38] sm:$0xff]
    %v101 = vld [vmem:[#allocation5 + $0x40] sm:$0xff]
    %v102 = vld [vmem:[#allocation5 + $0x48] sm:$0xff]
    %v103 = vld [vmem:[#allocation5 + $0x50] sm:$0xff]
    %v104 = vld [vmem:[#allocation5 + $0x58] sm:$0xff]
    %v105 = vld [vmem:[#allocation5 + $0x60] sm:$0xff]
    %v106 = vld [vmem:[#allocation5 + $0x68] sm:$0xff]
    %v107 = vld [vmem:[#allocation5 + $0x70] sm:$0xff]
    %v108 = vld [vmem:[#allocation5 + $0x78] sm:$0xff]
    %v109 = vld [vmem:[#allocation5 + $0x80] sm:$0xff]
    %v110 = vld [vmem:[#allocation5 + $0x88] sm:$0xff]
    %v111 = vld [vmem:[#allocation5 + $0x90] sm:$0xff]
    %v112 = vld [vmem:[#allocation5 + $0x98] sm:$0xff]
    %v113 = vld [vmem:[#allocation5 + $0xa0] sm:$0xff]
    %v114 = vld [vmem:[#allocation5 + $0xa8] sm:$0xff]
    %v115 = vld [vmem:[#allocation5 + $0xb0] sm:$0xff]
    %v116 = vld [vmem:[#allocation5 + $0xb8] sm:$0xff]
    %v117 = vld [vmem:[#allocation5 + $0xc0] sm:$0xff]
    %v118 = vld [vmem:[#allocation5 + $0xc8] sm:$0xff]
    %v119 = vld [vmem:[#allocation5 + $0xd0] sm:$0xff]
    %v120 = vld [vmem:[#allocation5 + $0xd8] sm:$0xff]
    %v121 = vld [vmem:[#allocation5 + $0xe0] sm:$0xff]
    %v122 = vld [vmem:[#allocation5 + $0xe8] sm:$0xff]
    %v123 = vld [vmem:[#allocation5 + $0xf0] sm:$0xff]
    %v124 = vld [vmem:[#allocation5 + $0xf8] sm:$0xff]
    %v125 = vld [vmem:[#allocation5 + $0x100] sm:$0xff]
    %v126 = vld [vmem:[#allocation5 + $0x108] sm:$0xff]
    %v127 = vld [vmem:[#allocation5 + $0x110] sm:$0xff]
    %v128 = vld [vmem:[#allocation5 + $0x118] sm:$0xff]
    %v129 = vld [vmem:[#allocation5 + $0x120] sm:$0xff]
    %v130 = vld [vmem:[#allocation5 + $0x128] sm:$0xff]
    %v131 = vld [vmem:[#allocation5 + $0x130] sm:$0xff]
    %v132 = vld [vmem:[#allocation5 + $0x138] sm:$0xff]
    %v133 = vld [vmem:[#allocation5 + $0x140] sm:$0xff]
    %v134 = vld [vmem:[#allocation5 + $0x148] sm:$0xff]
    %v135 = vld [vmem:[#allocation5 + $0x150] sm:$0xff]
    %v136 = vld [vmem:[#allocation5 + $0x158] sm:$0xff]
    %v137 = vld [vmem:[#allocation5 + $0x160] sm:$0xff]
    %v138 = vld [vmem:[#allocation5 + $0x168] sm:$0xff]
    %v139 = vld [vmem:[#allocation5 + $0x170] sm:$0xff]
    %v140 = vld [vmem:[#allocation5 + $0x178] sm:$0xff]
    %v141 = vld [vmem:[#allocation7] sm:$0xff]
    %v142 = vld [vmem:[#allocation7 + $0x8] sm:$0xff]
    %v143 = vld [vmem:[#allocation7 + $0x10] sm:$0xff]
    %v144 = vld [vmem:[#allocation7 + $0x18] sm:$0xff]
    %v145 = vld [vmem:[#allocation7 + $0x20] sm:$0xff]
    %v146 = vld [vmem:[#allocation7 + $0x28] sm:$0xff]
    %v147 = vld [vmem:[#allocation7 + $0x30] sm:$0xff]
    %v148 = vld [vmem:[#allocation7 + $0x38] sm:$0xff]
    %v149 = vld [vmem:[#allocation7 + $0x40] sm:$0xff]
    %v150 = vld [vmem:[#allocation7 + $0x48] sm:$0xff]
    %v151 = vld [vmem:[#allocation7 + $0x50] sm:$0xff]
    %v152 = vld [vmem:[#allocation7 + $0x58] sm:$0xff]
    %v153 = vld [vmem:[#allocation7 + $0x60] sm:$0xff]
    %v154 = vld [vmem:[#allocation7 + $0x68] sm:$0xff]
    %v155 = vld [vmem:[#allocation7 + $0x70] sm:$0xff]
    %v156 = vld [vmem:[#allocation7 + $0x78] sm:$0xff]
    %v157 = vld [vmem:[%s3] sm:$0x1]
    %v158 = vld [vmem:[%s4] sm:$0x1]
    %v159 = vld [vmem:[#allocation2] sm:$0xff]
    %v160 = vld [vmem:[#allocation2 + $0x8] sm:$0xff]
    %v161 = vrot.slane %v159, 7
    %v162 = vrot.slane %v160, 7
    %vm163 = vcmp.lt.s32.totalorder %v63, 1
    %v164 = vsel %vm163, %v161, %v162
    %v165 = vsel %vm163, %v162, %v161
    %v166 = vsel %vm89, 0.0, %v165
    %v167 = vsel %vm90, 0.0, %v164
    %v168 = vrot.slane %v159, 1
    %v169 = vrot.slane %v160, 1
    %vm170 = vcmp.lt.s32.totalorder %v63, 7
    %v171 = vsel %vm170, %v168, %v169
    %v172 = vsel %vm170, %v169, %v168
    %v173 = vsel %vm91, 0.0, %v171
    %v174 = vsel %vm92, 0.0, %v172
    %175 = vmatprep.subr.mxu0 0.0
    %176 = vmatpush1.msra.mxu0 %v108
    %177 = vmatprep.subr.mxu0 0.0
    %178 = vmatpush1.msra.mxu0 %v107
    %179 = vmatprep.subr.mxu0 0.0
    %180 = vmatpush1.msra.mxu0 %v106
    %181 = vmatprep.subr.mxu0 0.0
    %182 = vmatpush1.msra.mxu0 %v105
    %183 = vmatprep.subr.mxu0 0.0
    %184 = vmatpush1.msra.mxu0 %v104
    %185 = vmatprep.subr.mxu0 0.0
    %186 = vmatpush1.msra.mxu0 %v103
    %187 = vmatprep.subr.mxu0 0.0
    %188 = vmatpush1.msra.mxu0 %v102
    %189 = vmatprep.subr.mxu0 0.0
    %190 = vmatpush1.msra.mxu0 %v101
    %191 = vmatprep.subr.mxu0 0.0
    %192 = vmatpush1.msra.mxu0 %v100
    %193 = vmatprep.subr.mxu0 0.0
    %194 = vmatpush1.msra.mxu0 %v99
    %195 = vmatprep.subr.mxu0 0.0
    %196 = vmatpush1.msra.mxu0 %v98
    %197 = vmatprep.subr.mxu0 0.0
    %198 = vmatpush1.msra.mxu0 %v97
    %199 = vmatprep.subr.mxu0 0.0
    %200 = vmatpush1.msra.mxu0 %v96
    %201 = vmatprep.subr.mxu0 0.0
    %202 = vmatpush1.msra.mxu0 %v95
    %203 = vmatprep.subr.mxu0 0.0
    %204 = vmatpush1.msra.mxu0 %v94
    %205 = vmatprep.subr.mxu0 0.0
    %206 = vmatpush1.msra.mxu0 %v93
    %207 = vmatprep.subr.mxu0 0.0
    %208 = vmatpush2.msra.mxu0 %v124
    %209 = vmatprep.subr.mxu0 0.0
    %210 = vmatpush2.msra.mxu0 %v123
    %211 = vmatprep.subr.mxu0 0.0
    %212 = vmatpush2.msra.mxu0 %v122
    %213 = vmatprep.subr.mxu0 0.0
    %214 = vmatpush2.msra.mxu0 %v121
    %215 = vmatprep.subr.mxu0 0.0
    %216 = vmatpush2.msra.mxu0 %v120
    %217 = vmatprep.subr.mxu0 0.0
    %218 = vmatpush2.msra.mxu0 %v119
    %219 = vmatprep.subr.mxu0 0.0
    %220 = vmatpush2.msra.mxu0 %v118
    %221 = vmatprep.subr.mxu0 0.0
    %222 = vmatpush2.msra.mxu0 %v117
    %223 = vmatprep.subr.mxu0 0.0
    %224 = vmatpush2.msra.mxu0 %v116
    %225 = vmatprep.subr.mxu0 0.0
    %226 = vmatpush2.msra.mxu0 %v115
    %227 = vmatprep.subr.mxu0 0.0
    %228 = vmatpush2.msra.mxu0 %v114
    %229 = vmatprep.subr.mxu0 0.0
    %230 = vmatpush2.msra.mxu0 %v113
    %231 = vmatprep.subr.mxu0 0.0
    %232 = vmatpush2.msra.mxu0 %v112
    %233 = vmatprep.subr.mxu0 0.0
    %234 = vmatpush2.msra.mxu0 %v111
    %235 = vmatprep.subr.mxu0 0.0
    %236 = vmatpush2.msra.mxu0 %v110
    %237 = vmatprep.subr.mxu0 0.0
    %238 = vmatpush2.msra.mxu0 %v109
    %239 = vmatprep.mubr.f32.mxu0 %v159
    %240 = vmatmul.mubr.f32.gmra.mxu0 %v166
    %v241 = vpop.f32.mrf.mxu0
    %v242 = vadd.f32 0.0, %v241
    %v243 = vpop.f32.mrf.mxu0
    %244 = vmatprep.mubr.f32.mxu0 %v160
    %245 = vmatmul.mubr.f32.gmra.mxu0 %v167
    %v246 = vpop.f32.mrf.mxu0
    %v247 = vadd.f32 0.0, %v246
    %v248 = vpop.f32.mrf.mxu0
    %249 = vdwg.mxu0
    %250 = vmatprep.subr.mxu0 0.0
    %251 = vmatpush1.msra.mxu0 %v140
    %252 = vmatprep.subr.mxu0 0.0
    %253 = vmatpush1.msra.mxu0 %v139
    %254 = vmatprep.subr.mxu0 0.0
    %255 = vmatpush1.msra.mxu0 %v138
    %256 = vmatprep.subr.mxu0 0.0
    %257 = vmatpush1.msra.mxu0 %v137
    %258 = vmatprep.subr.mxu0 0.0
    %259 = vmatpush1.msra.mxu0 %v136
    %260 = vmatprep.subr.mxu0 0.0
    %261 = vmatpush1.msra.mxu0 %v135
    %262 = vmatprep.subr.mxu0 0.0
    %263 = vmatpush1.msra.mxu0 %v134
    %264 = vmatprep.subr.mxu0 0.0
    %265 = vmatpush1.msra.mxu0 %v133
    %266 = vmatprep.subr.mxu0 0.0
    %267 = vmatpush1.msra.mxu0 %v132
    %268 = vmatprep.subr.mxu0 0.0
    %269 = vmatpush1.msra.mxu0 %v131
    %270 = vmatprep.subr.mxu0 0.0
    %271 = vmatpush1.msra.mxu0 %v130
    %272 = vmatprep.subr.mxu0 0.0
    %273 = vmatpush1.msra.mxu0 %v129
    %274 = vmatprep.subr.mxu0 0.0
    %275 = vmatpush1.msra.mxu0 %v128
    %276 = vmatprep.subr.mxu0 0.0
    %277 = vmatpush1.msra.mxu0 %v127
    %278 = vmatprep.subr.mxu0 0.0
    %279 = vmatpush1.msra.mxu0 %v126
    %280 = vmatprep.subr.mxu0 0.0
    %281 = vmatpush1.msra.mxu0 %v125
    %282 = vmatprep.subr.mxu0 0.0
    %283 = vmatpush2.msra.mxu0 0.0
    %284 = vmatprep.subr.mxu0 0.0
    %285 = vmatpush2.msra.mxu0 0.0
    %286 = vmatprep.subr.mxu0 0.0
    %287 = vmatpush2.msra.mxu0 0.0
    %288 = vmatprep.subr.mxu0 0.0
    %289 = vmatpush2.msra.mxu0 0.0
    %290 = vmatprep.subr.mxu0 0.0
    %291 = vmatpush2.msra.mxu0 0.0
    %292 = vmatprep.subr.mxu0 0.0
    %293 = vmatpush2.msra.mxu0 0.0
    %294 = vmatprep.subr.mxu0 0.0
    %295 = vmatpush2.msra.mxu0 0.0
    %296 = vmatprep.subr.mxu0 0.0
    %297 = vmatpush2.msra.mxu0 0.0
    %298 = vmatprep.subr.mxu0 0.0
    %299 = vmatpush2.msra.mxu0 0.0
    %300 = vmatprep.subr.mxu0 0.0
    %301 = vmatpush2.msra.mxu0 0.0
    %302 = vmatprep.subr.mxu0 0.0
    %303 = vmatpush2.msra.mxu0 0.0
    %304 = vmatprep.subr.mxu0 0.0
    %305 = vmatpush2.msra.mxu0 0.0
    %306 = vmatprep.subr.mxu0 0.0
    %307 = vmatpush2.msra.mxu0 0.0
    %308 = vmatprep.subr.mxu0 0.0
    %309 = vmatpush2.msra.mxu0 0.0
    %310 = vmatprep.subr.mxu0 0.0
    %311 = vmatpush2.msra.mxu0 0.0
    %312 = vmatprep.subr.mxu0 0.0
    %313 = vmatpush2.msra.mxu0 0.0
    %314 = vmatprep.mubr.f32.mxu0 0.0
    %315 = vmatmul.mubr.f32.gmra.mxu0 %v173
    %v316 = vpop.f32.mrf.mxu0
    %v317 = vadd.f32 %v242, %v316
    %v318 = vpop.f32.mrf.mxu0
    %319 = vmatprep.mubr.f32.mxu0 0.0
    %320 = vmatmul.mubr.f32.gmra.mxu0 %v174
    %v321 = vpop.f32.mrf.mxu0
    %v322 = vadd.f32 %v247, %v321
    %v323 = vpop.f32.mrf.mxu0
    %324 = vdwg.mxu0
    %v325 = vadd.f32 %v317, %v322
    %v326 = vrot.slane %v325, 4
    %v327 = vadd.f32 %v325, %v326
    %v328 = vrot.slane %v327, 2
    %v329 = vadd.f32 %v327, %v328
    %v330 = vrot.slane %v329, 1
    %v331 = vadd.f32 %v329, %v330
    %v332 = vmul.f32 %v317, %v317
    %v333 = vmul.f32 %v322, %v322
    %v334 = vadd.f32 %v332, %v333
    %v335 = vrot.slane %v334, 4
    %v336 = vadd.f32 %v334, %v335
    %v337 = vrot.slane %v336, 2
    %v338 = vadd.f32 %v336, %v337
    %v339 = vrot.slane %v338, 1
    %v340 = vadd.f32 %v338, %v339
    %vm341 = vcmask 1040384
    %v342 = vsel %vm341, %v331, %v340
    %343 = vmatprep.subr.mxu0 0.0
    %344 = vmatpush1.msra.mxu0 %v156
    %345 = vmatprep.subr.mxu0 0.0
    %346 = vmatpush1.msra.mxu0 %v155
    %347 = vmatprep.subr.mxu0 0.0
    %348 = vmatpush1.msra.mxu0 %v154
    %349 = vmatprep.subr.mxu0 0.0
    %350 = vmatpush1.msra.mxu0 %v153
    %351 = vmatprep.subr.mxu0 0.0
    %352 = vmatpush1.msra.mxu0 %v152
    %353 = vmatprep.subr.mxu0 0.0
    %354 = vmatpush1.msra.mxu0 %v151
    %355 = vmatprep.subr.mxu0 0.0
    %356 = vmatpush1.msra.mxu0 %v150
    %357 = vmatprep.subr.mxu0 0.0
    %358 = vmatpush1.msra.mxu0 %v149
    %359 = vmatprep.subr.mxu0 0.0
    %360 = vmatpush1.msra.mxu0 %v148
    %361 = vmatprep.subr.mxu0 0.0
    %362 = vmatpush1.msra.mxu0 %v147
    %363 = vmatprep.subr.mxu0 0.0
    %364 = vmatpush1.msra.mxu0 %v146
    %365 = vmatprep.subr.mxu0 0.0
    %366 = vmatpush1.msra.mxu0 %v145
    %367 = vmatprep.subr.mxu0 0.0
    %368 = vmatpush1.msra.mxu0 %v144
    %369 = vmatprep.subr.mxu0 0.0
    %370 = vmatpush1.msra.mxu0 %v143
    %371 = vmatprep.subr.mxu0 0.0
    %372 = vmatpush1.msra.mxu0 %v142
    %373 = vmatprep.subr.mxu0 0.0
    %374 = vmatpush1.msra.mxu0 %v141
    %375 = vmatprep.subr.mxu0 0.0
    %376 = vmatpush2.msra.mxu0 0.0
    %377 = vmatprep.subr.mxu0 0.0
    %378 = vmatpush2.msra.mxu0 0.0
    %379 = vmatprep.subr.mxu0 0.0
    %380 = vmatpush2.msra.mxu0 0.0
    %381 = vmatprep.subr.mxu0 0.0
    %382 = vmatpush2.msra.mxu0 0.0
    %383 = vmatprep.subr.mxu0 0.0
    %384 = vmatpush2.msra.mxu0 0.0
    %385 = vmatprep.subr.mxu0 0.0
    %386 = vmatpush2.msra.mxu0 0.0
    %387 = vmatprep.subr.mxu0 0.0
    %388 = vmatpush2.msra.mxu0 0.0
    %389 = vmatprep.subr.mxu0 0.0
    %390 = vmatpush2.msra.mxu0 0.0
    %391 = vmatprep.subr.mxu0 0.0
    %392 = vmatpush2.msra.mxu0 0.0
    %393 = vmatprep.subr.mxu0 0.0
    %394 = vmatpush2.msra.mxu0 0.0
    %395 = vmatprep.subr.mxu0 0.0
    %396 = vmatpush2.msra.mxu0 0.0
    %397 = vmatprep.subr.mxu0 0.0
    %398 = vmatpush2.msra.mxu0 0.0
    %399 = vmatprep.subr.mxu0 0.0
    %400 = vmatpush2.msra.mxu0 0.0
    %401 = vmatprep.subr.mxu0 0.0
    %402 = vmatpush2.msra.mxu0 0.0
    %403 = vmatprep.subr.mxu0 0.0
    %404 = vmatpush2.msra.mxu0 0.0
    %405 = vmatprep.subr.mxu0 0.0
    %406 = vmatpush2.msra.mxu0 0.0
    %407 = vmatprep.mubr.f32.mxu0 0.0
    %408 = vmatmul.mubr.f32.gmra.mxu0 %v342
    %v409 = vpop.f32.mrf.mxu0
    %v410 = vadd.f32 0.0, %v409
    %v411 = vpop.f32.mrf.mxu0
    %412 = vdwg.mxu0
    %v413 = vmul.f32 %v410, %v410
    %v415 = vrot.slane %v413, 7
    %v417 = vsub.f32 %v410, %v415
    %v418 = vmax.f32 %v417, 0.0
    %v419 = vadd.f32 %v418, 1e-05
    %v420 = vrsqrt.pop %v419
    %v422 = vlaneseq
    %v423 = vshrl.u32 %v422, 7
    %v424 = vsub.s32 0, %v423
    %v425 = vrot.slane %v157, %v424
    %v427 = vmul.f32 %v420, %v425
    %v428 = vlaneseq
    %v429 = vshrl.u32 %v428, 7
    %v430 = vsub.s32 0, %v429
    %v431 = vrot.slane %v410, %v430
    %v432 = vsub.f32 %v317, %v431
    %v433 = vsub.f32 %v322, %v431
    %v434 = vlaneseq
    %v435 = vshrl.u32 %v434, 7
    %v436 = vsub.s32 1, %v435
    %v437 = vrot.slane %v427, %v436
    %v438 = vmul.f32 %v432, %v437
    %v439 = vmul.f32 %v433, %v437
    %v441 = vlaneseq
    %v442 = vshrl.u32 %v441, 7
    %v443 = vsub.s32 0, %v442
    %v444 = vrot.slane %v158, %v443
    %v446 = vadd.f32 %v438, %v444
    %v447 = vadd.f32 %v439, %v444
    %v448 = vmax.f32 %v446, 0.0
    %v449 = vmax.f32 %v447, 0.0
    %v450 = vadd.f32 %v159, %v448
    %v451 = vadd.f32 %v160, %v449
    %v452 = vrot.slane %v450, 7
    %v453 = vrot.slane %v451, 7
    %v454 = vsel %vm163, %v452, %v453
    %v455 = vsel %vm163, %v453, %v452
    %v456 = vsel %vm89, 0.0, %v455
    %v457 = vsel %vm90, 0.0, %v454
    %v458 = vrot.slane %v450, 1
    %v459 = vrot.slane %v451, 1
    %v460 = vsel %vm170, %v458, %v459
    %v461 = vsel %vm170, %v459, %v458
    %v462 = vsel %vm91, 0.0, %v460
    %v463 = vsel %vm92, 0.0, %v461
    %464 = vmatprep.subr.mxu0 0.0
    %465 = vmatpush1.msra.mxu0 %v108
    %466 = vmatprep.subr.mxu0 0.0
    %467 = vmatpush1.msra.mxu0 %v107
    %468 = vmatprep.subr.mxu0 0.0
    %469 = vmatpush1.msra.mxu0 %v106
    %470 = vmatprep.subr.mxu0 0.0
    %471 = vmatpush1.msra.mxu0 %v105
    %472 = vmatprep.subr.mxu0 0.0
    %473 = vmatpush1.msra.mxu0 %v104
    %474 = vmatprep.subr.mxu0 0.0
    %475 = vmatpush1.msra.mxu0 %v103
    %476 = vmatprep.subr.mxu0 0.0
    %477 = vmatpush1.msra.mxu0 %v102
    %478 = vmatprep.subr.mxu0 0.0
    %479 = vmatpush1.msra.mxu0 %v101
    %480 = vmatprep.subr.mxu0 0.0
    %481 = vmatpush1.msra.mxu0 %v100
    %482 = vmatprep.subr.mxu0 0.0
    %483 = vmatpush1.msra.mxu0 %v99
    %484 = vmatprep.subr.mxu0 0.0
    %485 = vmatpush1.msra.mxu0 %v98
    %486 = vmatprep.subr.mxu0 0.0
    %487 = vmatpush1.msra.mxu0 %v97
    %488 = vmatprep.subr.mxu0 0.0
    %489 = vmatpush1.msra.mxu0 %v96
    %490 = vmatprep.subr.mxu0 0.0
    %491 = vmatpush1.msra.mxu0 %v95
    %492 = vmatprep.subr.mxu0 0.0
    %493 = vmatpush1.msra.mxu0 %v94
    %494 = vmatprep.subr.mxu0 0.0
    %495 = vmatpush1.msra.mxu0 %v93
    %496 = vmatprep.subr.mxu0 0.0
    %497 = vmatpush2.msra.mxu0 %v124
    %498 = vmatprep.subr.mxu0 0.0
    %499 = vmatpush2.msra.mxu0 %v123
    %500 = vmatprep.subr.mxu0 0.0
    %501 = vmatpush2.msra.mxu0 %v122
    %502 = vmatprep.subr.mxu0 0.0
    %503 = vmatpush2.msra.mxu0 %v121
    %504 = vmatprep.subr.mxu0 0.0
    %505 = vmatpush2.msra.mxu0 %v120
    %506 = vmatprep.subr.mxu0 0.0
    %507 = vmatpush2.msra.mxu0 %v119
    %508 = vmatprep.subr.mxu0 0.0
    %509 = vmatpush2.msra.mxu0 %v118
    %510 = vmatprep.subr.mxu0 0.0
    %511 = vmatpush2.msra.mxu0 %v117
    %512 = vmatprep.subr.mxu0 0.0
    %513 = vmatpush2.msra.mxu0 %v116
    %514 = vmatprep.subr.mxu0 0.0
    %515 = vmatpush2.msra.mxu0 %v115
    %516 = vmatprep.subr.mxu0 0.0
    %517 = vmatpush2.msra.mxu0 %v114
    %518 = vmatprep.subr.mxu0 0.0
    %519 = vmatpush2.msra.mxu0 %v113
    %520 = vmatprep.subr.mxu0 0.0
    %521 = vmatpush2.msra.mxu0 %v112
    %522 = vmatprep.subr.mxu0 0.0
    %523 = vmatpush2.msra.mxu0 %v111
    %524 = vmatprep.subr.mxu0 0.0
    %525 = vmatpush2.msra.mxu0 %v110
    %526 = vmatprep.subr.mxu0 0.0
    %527 = vmatpush2.msra.mxu0 %v109
    %528 = vmatprep.mubr.f32.mxu0 %v450
    %529 = vmatmul.mubr.f32.gmra.mxu0 %v456
    %v530 = vpop.f32.mrf.mxu0
    %v531 = vadd.f32 0.0, %v530
    %v532 = vpop.f32.mrf.mxu0
    %533 = vmatprep.mubr.f32.mxu0 %v451
    %534 = vmatmul.mubr.f32.gmra.mxu0 %v457
    %v535 = vpop.f32.mrf.mxu0
    %v536 = vadd.f32 0.0, %v535
    %v537 = vpop.f32.mrf.mxu0
    %538 = vdwg.mxu0
    %539 = vmatprep.subr.mxu0 0.0
    %540 = vmatpush1.msra.mxu0 %v140
    %541 = vmatprep.subr.mxu0 0.0
    %542 = vmatpush1.msra.mxu0 %v139
    %543 = vmatprep.subr.mxu0 0.0
    %544 = vmatpush1.msra.mxu0 %v138
    %545 = vmatprep.subr.mxu0 0.0
    %546 = vmatpush1.msra.mxu0 %v137
    %547 = vmatprep.subr.mxu0 0.0
    %548 = vmatpush1.msra.mxu0 %v136
    %549 = vmatprep.subr.mxu0 0.0
    %550 = vmatpush1.msra.mxu0 %v135
    %551 = vmatprep.subr.mxu0 0.0
    %552 = vmatpush1.msra.mxu0 %v134
    %553 = vmatprep.subr.mxu0 0.0
    %554 = vmatpush1.msra.mxu0 %v133
    %555 = vmatprep.subr.mxu0 0.0
    %556 = vmatpush1.msra.mxu0 %v132
    %557 = vmatprep.subr.mxu0 0.0
    %558 = vmatpush1.msra.mxu0 %v131
    %559 = vmatprep.subr.mxu0 0.0
    %560 = vmatpush1.msra.mxu0 %v130
    %561 = vmatprep.subr.mxu0 0.0
    %562 = vmatpush1.msra.mxu0 %v129
    %563 = vmatprep.subr.mxu0 0.0
    %564 = vmatpush1.msra.mxu0 %v128
    %565 = vmatprep.subr.mxu0 0.0
    %566 = vmatpush1.msra.mxu0 %v127
    %567 = vmatprep.subr.mxu0 0.0
    %568 = vmatpush1.msra.mxu0 %v126
    %569 = vmatprep.subr.mxu0 0.0
    %570 = vmatpush1.msra.mxu0 %v125
    %571 = vmatprep.subr.mxu0 0.0
    %572 = vmatpush2.msra.mxu0 0.0
    %573 = vmatprep.subr.mxu0 0.0
    %574 = vmatpush2.msra.mxu0 0.0
    %575 = vmatprep.subr.mxu0 0.0
    %576 = vmatpush2.msra.mxu0 0.0
    %577 = vmatprep.subr.mxu0 0.0
    %578 = vmatpush2.msra.mxu0 0.0
    %579 = vmatprep.subr.mxu0 0.0
    %580 = vmatpush2.msra.mxu0 0.0
    %581 = vmatprep.subr.mxu0 0.0
    %582 = vmatpush2.msra.mxu0 0.0
    %583 = vmatprep.subr.mxu0 0.0
    %584 = vmatpush2.msra.mxu0 0.0
    %585 = vmatprep.subr.mxu0 0.0
    %586 = vmatpush2.msra.mxu0 0.0
    %587 = vmatprep.subr.mxu0 0.0
    %588 = vmatpush2.msra.mxu0 0.0
    %589 = vmatprep.subr.mxu0 0.0
    %590 = vmatpush2.msra.mxu0 0.0
    %591 = vmatprep.subr.mxu0 0.0
    %592 = vmatpush2.msra.mxu0 0.0
    %593 = vmatprep.subr.mxu0 0.0
    %594 = vmatpush2.msra.mxu0 0.0
    %595 = vmatprep.subr.mxu0 0.0
    %596 = vmatpush2.msra.mxu0 0.0
    %597 = vmatprep.subr.mxu0 0.0
    %598 = vmatpush2.msra.mxu0 0.0
    %599 = vmatprep.subr.mxu0 0.0
    %600 = vmatpush2.msra.mxu0 0.0
    %601 = vmatprep.subr.mxu0 0.0
    %602 = vmatpush2.msra.mxu0 0.0
    %603 = vmatprep.mubr.f32.mxu0 0.0
    %604 = vmatmul.mubr.f32.gmra.mxu0 %v462
    %v605 = vpop.f32.mrf.mxu0
    %v606 = vadd.f32 %v531, %v605
    %v607 = vpop.f32.mrf.mxu0
    %608 = vmatprep.mubr.f32.mxu0 0.0
    %609 = vmatmul.mubr.f32.gmra.mxu0 %v463
    %v610 = vpop.f32.mrf.mxu0
    %v611 = vadd.f32 %v536, %v610
    %v612 = vpop.f32.mrf.mxu0
    %613 = vdwg.mxu0
    %v614 = vadd.f32 %v606, %v611
    %v615 = vrot.slane %v614, 4
    %v616 = vadd.f32 %v614, %v615
    %v617 = vrot.slane %v616, 2
    %v618 = vadd.f32 %v616, %v617
    %v619 = vrot.slane %v618, 1
    %v620 = vadd.f32 %v618, %v619
    %v621 = vmul.f32 %v606, %v606
    %v622 = vmul.f32 %v611, %v611
    %v623 = vadd.f32 %v621, %v622
    %v624 = vrot.slane %v623, 4
    %v625 = vadd.f32 %v623, %v624
    %v626 = vrot.slane %v625, 2
    %v627 = vadd.f32 %v625, %v626
    %v628 = vrot.slane %v627, 1
    %v629 = vadd.f32 %v627, %v628
    %v630 = vsel %vm341, %v620, %v629
    %631 = vmatprep.subr.mxu0 0.0
    %632 = vmatpush1.msra.mxu0 %v156
    %633 = vmatprep.subr.mxu0 0.0
    %634 = vmatpush1.msra.mxu0 %v155
    %635 = vmatprep.subr.mxu0 0.0
    %636 = vmatpush1.msra.mxu0 %v154
    %637 = vmatprep.subr.mxu0 0.0
    %638 = vmatpush1.msra.mxu0 %v153
    %639 = vmatprep.subr.mxu0 0.0
    %640 = vmatpush1.msra.mxu0 %v152
    %641 = vmatprep.subr.mxu0 0.0
    %642 = vmatpush1.msra.mxu0 %v151
    %643 = vmatprep.subr.mxu0 0.0
    %644 = vmatpush1.msra.mxu0 %v150
    %645 = vmatprep.subr.mxu0 0.0
    %646 = vmatpush1.msra.mxu0 %v149
    %647 = vmatprep.subr.mxu0 0.0
    %648 = vmatpush1.msra.mxu0 %v148
    %649 = vmatprep.subr.mxu0 0.0
    %650 = vmatpush1.msra.mxu0 %v147
    %651 = vmatprep.subr.mxu0 0.0
    %652 = vmatpush1.msra.mxu0 %v146
    %653 = vmatprep.subr.mxu0 0.0
    %654 = vmatpush1.msra.mxu0 %v145
    %655 = vmatprep.subr.mxu0 0.0
    %656 = vmatpush1.msra.mxu0 %v144
    %657 = vmatprep.subr.mxu0 0.0
    %658 = vmatpush1.msra.mxu0 %v143
    %659 = vmatprep.subr.mxu0 0.0
    %660 = vmatpush1.msra.mxu0 %v142
    %661 = vmatprep.subr.mxu0 0.0
    %662 = vmatpush1.msra.mxu0 %v141
    %663 = vmatprep.subr.mxu0 0.0
    %664 = vmatpush2.msra.mxu0 0.0
    %665 = vmatprep.subr.mxu0 0.0
    %666 = vmatpush2.msra.mxu0 0.0
    %667 = vmatprep.subr.mxu0 0.0
    %668 = vmatpush2.msra.mxu0 0.0
    %669 = vmatprep.subr.mxu0 0.0
    %670 = vmatpush2.msra.mxu0 0.0
    %671 = vmatprep.subr.mxu0 0.0
    %672 = vmatpush2.msra.mxu0 0.0
    %673 = vmatprep.subr.mxu0 0.0
    %674 = vmatpush2.msra.mxu0 0.0
    %675 = vmatprep.subr.mxu0 0.0
    %676 = vmatpush2.msra.mxu0 0.0
    %677 = vmatprep.subr.mxu0 0.0
    %678 = vmatpush2.msra.mxu0 0.0
    %679 = vmatprep.subr.mxu0 0.0
    %680 = vmatpush2.msra.mxu0 0.0
    %681 = vmatprep.subr.mxu0 0.0
    %682 = vmatpush2.msra.mxu0 0.0
    %683 = vmatprep.subr.mxu0 0.0
    %684 = vmatpush2.msra.mxu0 0.0
    %685 = vmatprep.subr.mxu0 0.0
    %686 = vmatpush2.msra.mxu0 0.0
    %687 = vmatprep.subr.mxu0 0.0
    %688 = vmatpush2.msra.mxu0 0.0
    %689 = vmatprep.subr.mxu0 0.0
    %690 = vmatpush2.msra.mxu0 0.0
    %691 = vmatprep.subr.mxu0 0.0
    %692 = vmatpush2.msra.mxu0 0.0
    %693 = vmatprep.subr.mxu0 0.0
    %694 = vmatpush2.msra.mxu0 0.0
    %695 = vmatprep.mubr.f32.mxu0 0.0
    %696 = vmatmul.mubr.f32.gmra.mxu0 %v630
    %v697 = vpop.f32.mrf.mxu0
    %v698 = vadd.f32 0.0, %v697
    %v699 = vpop.f32.mrf.mxu0
    %700 = vdwg.mxu0
    %v701 = vmul.f32 %v698, %v698
    %v703 = vrot.slane %v701, 7
    %v705 = vsub.f32 %v698, %v703
    %v706 = vmax.f32 %v705, 0.0
    %v707 = vadd.f32 %v706, 1e-05
    %v708 = vrsqrt.pop %v707
    %v709 = vmul.f32 %v708, %v425
    %v710 = vlaneseq
    %v711 = vshrl.u32 %v710, 7
    %v712 = vsub.s32 0, %v711
    %v713 = vrot.slane %v698, %v712
    %v714 = vsub.f32 %v606, %v713
    %v715 = vsub.f32 %v611, %v713
    %v716 = vlaneseq
    %v717 = vshrl.u32 %v716, 7
    %v718 = vsub.s32 1, %v717
    %v719 = vrot.slane %v709, %v718
    %v720 = vmul.f32 %v714, %v719
    %v721 = vmul.f32 %v715, %v719
    %v722 = vadd.f32 %v720, %v444
    %v723 = vadd.f32 %v721, %v444
    %v724 = vmax.f32 %v722, 0.0
    %v725 = vmax.f32 %v723, 0.0
    %v726 = vadd.f32 %v159, %v724
    %v727 = vadd.f32 %v160, %v725
    %v728 = vrot.slane %v726, 7
    %v729 = vrot.slane %v727, 7
    %v730 = vsel %vm163, %v728, %v729
    %v731 = vsel %vm163, %v729, %v728
    %v732 = vsel %vm89, 0.0, %v731
    %v733 = vsel %vm90, 0.0, %v730
    %v734 = vrot.slane %v726, 1
    %v735 = vrot.slane %v727, 1
    %v736 = vsel %vm170, %v734, %v735
    %v737 = vsel %vm170, %v735, %v734
    %v738 = vsel %vm91, 0.0, %v736
    %v739 = vsel %vm92, 0.0, %v737
    %740 = vmatprep.subr.mxu0 0.0
    %741 = vmatpush1.msra.mxu0 %v108
    %742 = vmatprep.subr.mxu0 0.0
    %743 = vmatpush1.msra.mxu0 %v107
    %744 = vmatprep.subr.mxu0 0.0
    %745 = vmatpush1.msra.mxu0 %v106
    %746 = vmatprep.subr.mxu0 0.0
    %747 = vmatpush1.msra.mxu0 %v105
    %748 = vmatprep.subr.mxu0 0.0
    %749 = vmatpush1.msra.mxu0 %v104
    %750 = vmatprep.subr.mxu0 0.0
    %751 = vmatpush1.msra.mxu0 %v103
    %752 = vmatprep.subr.mxu0 0.0
    %753 = vmatpush1.msra.mxu0 %v102
    %754 = vmatprep.subr.mxu0 0.0
    %755 = vmatpush1.msra.mxu0 %v101
    %756 = vmatprep.subr.mxu0 0.0
    %757 = vmatpush1.msra.mxu0 %v100
    %758 = vmatprep.subr.mxu0 0.0
    %759 = vmatpush1.msra.mxu0 %v99
    %760 = vmatprep.subr.mxu0 0.0
    %761 = vmatpush1.msra.mxu0 %v98
    %762 = vmatprep.subr.mxu0 0.0
    %763 = vmatpush1.msra.mxu0 %v97
    %764 = vmatprep.subr.mxu0 0.0
    %765 = vmatpush1.msra.mxu0 %v96
    %766 = vmatprep.subr.mxu0 0.0
    %767 = vmatpush1.msra.mxu0 %v95
    %768 = vmatprep.subr.mxu0 0.0
    %769 = vmatpush1.msra.mxu0 %v94
    %770 = vmatprep.subr.mxu0 0.0
    %771 = vmatpush1.msra.mxu0 %v93
    %772 = vmatprep.subr.mxu0 0.0
    %773 = vmatpush2.msra.mxu0 %v124
    %774 = vmatprep.subr.mxu0 0.0
    %775 = vmatpush2.msra.mxu0 %v123
    %776 = vmatprep.subr.mxu0 0.0
    %777 = vmatpush2.msra.mxu0 %v122
    %778 = vmatprep.subr.mxu0 0.0
    %779 = vmatpush2.msra.mxu0 %v121
    %780 = vmatprep.subr.mxu0 0.0
    %781 = vmatpush2.msra.mxu0 %v120
    %782 = vmatprep.subr.mxu0 0.0
    %783 = vmatpush2.msra.mxu0 %v119
    %784 = vmatprep.subr.mxu0 0.0
    %785 = vmatpush2.msra.mxu0 %v118
    %786 = vmatprep.subr.mxu0 0.0
    %787 = vmatpush2.msra.mxu0 %v117
    %788 = vmatprep.subr.mxu0 0.0
    %789 = vmatpush2.msra.mxu0 %v116
    %790 = vmatprep.subr.mxu0 0.0
    %791 = vmatpush2.msra.mxu0 %v115
    %792 = vmatprep.subr.mxu0 0.0
    %793 = vmatpush2.msra.mxu0 %v114
    %794 = vmatprep.subr.mxu0 0.0
    %795 = vmatpush2.msra.mxu0 %v113
    %796 = vmatprep.subr.mxu0 0.0
    %797 = vmatpush2.msra.mxu0 %v112
    %798 = vmatprep.subr.mxu0 0.0
    %799 = vmatpush2.msra.mxu0 %v111
    %800 = vmatprep.subr.mxu0 0.0
    %801 = vmatpush2.msra.mxu0 %v110
    %802 = vmatprep.subr.mxu0 0.0
    %803 = vmatpush2.msra.mxu0 %v109
    %804 = vmatprep.mubr.f32.mxu0 %v726
    %805 = vmatmul.mubr.f32.gmra.mxu0 %v732
    %v806 = vpop.f32.mrf.mxu0
    %v807 = vadd.f32 0.0, %v806
    %v808 = vpop.f32.mrf.mxu0
    %809 = vmatprep.mubr.f32.mxu0 %v727
    %810 = vmatmul.mubr.f32.gmra.mxu0 %v733
    %v811 = vpop.f32.mrf.mxu0
    %v812 = vadd.f32 0.0, %v811
    %v813 = vpop.f32.mrf.mxu0
    %814 = vdwg.mxu0
    %815 = vmatprep.subr.mxu0 0.0
    %816 = vmatpush1.msra.mxu0 %v140
    %817 = vmatprep.subr.mxu0 0.0
    %818 = vmatpush1.msra.mxu0 %v139
    %819 = vmatprep.subr.mxu0 0.0
    %820 = vmatpush1.msra.mxu0 %v138
    %821 = vmatprep.subr.mxu0 0.0
    %822 = vmatpush1.msra.mxu0 %v137
    %823 = vmatprep.subr.mxu0 0.0
    %824 = vmatpush1.msra.mxu0 %v136
    %825 = vmatprep.subr.mxu0 0.0
    %826 = vmatpush1.msra.mxu0 %v135
    %827 = vmatprep.subr.mxu0 0.0
    %828 = vmatpush1.msra.mxu0 %v134
    %829 = vmatprep.subr.mxu0 0.0
    %830 = vmatpush1.msra.mxu0 %v133
    %831 = vmatprep.subr.mxu0 0.0
    %832 = vmatpush1.msra.mxu0 %v132
    %833 = vmatprep.subr.mxu0 0.0
    %834 = vmatpush1.msra.mxu0 %v131
    %835 = vmatprep.subr.mxu0 0.0
    %836 = vmatpush1.msra.mxu0 %v130
    %837 = vmatprep.subr.mxu0 0.0
    %838 = vmatpush1.msra.mxu0 %v129
    %839 = vmatprep.subr.mxu0 0.0
    %840 = vmatpush1.msra.mxu0 %v128
    %841 = vmatprep.subr.mxu0 0.0
    %842 = vmatpush1.msra.mxu0 %v127
    %843 = vmatprep.subr.mxu0 0.0
    %844 = vmatpush1.msra.mxu0 %v126
    %845 = vmatprep.subr.mxu0 0.0
    %846 = vmatpush1.msra.mxu0 %v125
    %847 = vmatprep.subr.mxu0 0.0
    %848 = vmatpush2.msra.mxu0 0.0
    %849 = vmatprep.subr.mxu0 0.0
    %850 = vmatpush2.msra.mxu0 0.0
    %851 = vmatprep.subr.mxu0 0.0
    %852 = vmatpush2.msra.mxu0 0.0
    %853 = vmatprep.subr.mxu0 0.0
    %854 = vmatpush2.msra.mxu0 0.0
    %855 = vmatprep.subr.mxu0 0.0
    %856 = vmatpush2.msra.mxu0 0.0
    %857 = vmatprep.subr.mxu0 0.0
    %858 = vmatpush2.msra.mxu0 0.0
    %859 = vmatprep.subr.mxu0 0.0
    %860 = vmatpush2.msra.mxu0 0.0
    %861 = vmatprep.subr.mxu0 0.0
    %862 = vmatpush2.msra.mxu0 0.0
    %863 = vmatprep.subr.mxu0 0.0
    %864 = vmatpush2.msra.mxu0 0.0
    %865 = vmatprep.subr.mxu0 0.0
    %866 = vmatpush2.msra.mxu0 0.0
    %867 = vmatprep.subr.mxu0 0.0
    %868 = vmatpush2.msra.mxu0 0.0
    %869 = vmatprep.subr.mxu0 0.0
    %870 = vmatpush2.msra.mxu0 0.0
    %871 = vmatprep.subr.mxu0 0.0
    %872 = vmatpush2.msra.mxu0 0.0
    %873 = vmatprep.subr.mxu0 0.0
    %874 = vmatpush2.msra.mxu0 0.0
    %875 = vmatprep.subr.mxu0 0.0
    %876 = vmatpush2.msra.mxu0 0.0
    %877 = vmatprep.subr.mxu0 0.0
    %878 = vmatpush2.msra.mxu0 0.0
    %879 = vmatprep.mubr.f32.mxu0 0.0
    %880 = vmatmul.mubr.f32.gmra.mxu0 %v738
    %v881 = vpop.f32.mrf.mxu0
    %v882 = vadd.f32 %v807, %v881
    %v883 = vpop.f32.mrf.mxu0
    %884 = vmatprep.mubr.f32.mxu0 0.0
    %885 = vmatmul.mubr.f32.gmra.mxu0 %v739
    %v886 = vpop.f32.mrf.mxu0
    %v887 = vadd.f32 %v812, %v886
    %v888 = vpop.f32.mrf.mxu0
    %889 = vdwg.mxu0
    %v890 = vadd.f32 %v882, %v887
    %v891 = vrot.slane %v890, 4
    %v892 = vadd.f32 %v890, %v891
    %v893 = vrot.slane %v892, 2
    %v894 = vadd.f32 %v892, %v893
    %v895 = vrot.slane %v894, 1
    %v896 = vadd.f32 %v894, %v895
    %v897 = vmul.f32 %v882, %v882
    %v898 = vmul.f32 %v887, %v887
    %v899 = vadd.f32 %v897, %v898
    %v900 = vrot.slane %v899, 4
    %v901 = vadd.f32 %v899, %v900
    %v902 = vrot.slane %v901, 2
    %v903 = vadd.f32 %v901, %v902
    %v904 = vrot.slane %v903, 1
    %v905 = vadd.f32 %v903, %v904
    %v906 = vsel %vm341, %v896, %v905
    %907 = vmatprep.subr.mxu0 0.0
    %908 = vmatpush1.msra.mxu0 %v156
    %909 = vmatprep.subr.mxu0 0.0
    %910 = vmatpush1.msra.mxu0 %v155
    %911 = vmatprep.subr.mxu0 0.0
    %912 = vmatpush1.msra.mxu0 %v154
    %913 = vmatprep.subr.mxu0 0.0
    %914 = vmatpush1.msra.mxu0 %v153
    %915 = vmatprep.subr.mxu0 0.0
    %916 = vmatpush1.msra.mxu0 %v152
    %917 = vmatprep.subr.mxu0 0.0
    %918 = vmatpush1.msra.mxu0 %v151
    %919 = vmatprep.subr.mxu0 0.0
    %920 = vmatpush1.msra.mxu0 %v150
    %921 = vmatprep.subr.mxu0 0.0
    %922 = vmatpush1.msra.mxu0 %v149
    %923 = vmatprep.subr.mxu0 0.0
    %924 = vmatpush1.msra.mxu0 %v148
    %925 = vmatprep.subr.mxu0 0.0
    %926 = vmatpush1.msra.mxu0 %v147
    %927 = vmatprep.subr.mxu0 0.0
    %928 = vmatpush1.msra.mxu0 %v146
    %929 = vmatprep.subr.mxu0 0.0
    %930 = vmatpush1.msra.mxu0 %v145
    %931 = vmatprep.subr.mxu0 0.0
    %932 = vmatpush1.msra.mxu0 %v144
    %933 = vmatprep.subr.mxu0 0.0
    %934 = vmatpush1.msra.mxu0 %v143
    %935 = vmatprep.subr.mxu0 0.0
    %936 = vmatpush1.msra.mxu0 %v142
    %937 = vmatprep.subr.mxu0 0.0
    %938 = vmatpush1.msra.mxu0 %v141
    %939 = vmatprep.subr.mxu0 0.0
    %940 = vmatpush2.msra.mxu0 0.0
    %941 = vmatprep.subr.mxu0 0.0
    %942 = vmatpush2.msra.mxu0 0.0
    %943 = vmatprep.subr.mxu0 0.0
    %944 = vmatpush2.msra.mxu0 0.0
    %945 = vmatprep.subr.mxu0 0.0
    %946 = vmatpush2.msra.mxu0 0.0
    %947 = vmatprep.subr.mxu0 0.0
    %948 = vmatpush2.msra.mxu0 0.0
    %949 = vmatprep.subr.mxu0 0.0
    %950 = vmatpush2.msra.mxu0 0.0
    %951 = vmatprep.subr.mxu0 0.0
    %952 = vmatpush2.msra.mxu0 0.0
    %953 = vmatprep.subr.mxu0 0.0
    %954 = vmatpush2.msra.mxu0 0.0
    %955 = vmatprep.subr.mxu0 0.0
    %956 = vmatpush2.msra.mxu0 0.0
    %957 = vmatprep.subr.mxu0 0.0
    %958 = vmatpush2.msra.mxu0 0.0
    %959 = vmatprep.subr.mxu0 0.0
    %960 = vmatpush2.msra.mxu0 0.0
    %961 = vmatprep.subr.mxu0 0.0
    %962 = vmatpush2.msra.mxu0 0.0
    %963 = vmatprep.subr.mxu0 0.0
    %964 = vmatpush2.msra.mxu0 0.0
    %965 = vmatprep.subr.mxu0 0.0
    %966 = vmatpush2.msra.mxu0 0.0
    %967 = vmatprep.subr.mxu0 0.0
    %968 = vmatpush2.msra.mxu0 0.0
    %969 = vmatprep.subr.mxu0 0.0
    %970 = vmatpush2.msra.mxu0 0.0
    %971 = vmatprep.mubr.f32.mxu0 0.0
    %972 = vmatmul.mubr.f32.gmra.mxu0 %v906
    %v973 = vpop.f32.mrf.mxu0
    %v974 = vadd.f32 0.0, %v973
    %v975 = vpop.f32.mrf.mxu0
    %976 = vdwg.mxu0
    %v977 = vmul.f32 %v974, %v974
    %v979 = vrot.slane %v977, 7
    %v981 = vsub.f32 %v974, %v979
    %v982 = vmax.f32 %v981, 0.0
    %v983 = vadd.f32 %v982, 1e-05
    %v984 = vrsqrt.pop %v983
    %v985 = vmul.f32 %v984, %v425
    %v986 = vlaneseq
    %v987 = vshrl.u32 %v986, 7
    %v988 = vsub.s32 0, %v987
    %v989 = vrot.slane %v974, %v988
    %v990 = vsub.f32 %v882, %v989
    %v991 = vsub.f32 %v887, %v989
    %v992 = vlaneseq
    %v993 = vshrl.u32 %v992, 7
    %v994 = vsub.s32 1, %v993
    %v995 = vrot.slane %v985, %v994
    %v996 = vmul.f32 %v990, %v995
    %v997 = vmul.f32 %v991, %v995
    %v998 = vadd.f32 %v996, %v444
    %v999 = vadd.f32 %v997, %v444
    %v1000 = vmax.f32 %v998, 0.0
    %v1001 = vmax.f32 %v999, 0.0
    %1002 = vst [vmem:[#allocation8] sm:$0xff] %v1000
    %1003 = vst [vmem:[#allocation8 + $0x8] sm:$0xff] %v1001
    // Predicated region
    $region34: #{tpu_custom_call.1} parent=1 // pred_check
      _
    $region35: #{tpu_custom_call.1} parent=1 // pred_check_branch
      %1005 = sbr.rel (0) target = $region37
    $region36: #{tpu_custom_call.1} parent=1 // pred_region
      %s1007 = ssub.s32 256, 256
      %1008 = vsyncadd [#allocation4], %s1007
      %s1009 = sshll.u32 [#allocation8], 4
      %s1010 = int_to_ptr.vmem [resolvable:$true] %s1009
      %1015 = dma.vmem_to_hbm [thread:$0]  %s1010, 256, %s5, [#allocation4], 128, 128, 8
    $region37: #{tpu_custom_call.1} parent=1 // pred_fallthru
      _
    // Predicated region
    $region38: #{tpu_custom_call.1} parent=1 // pred_check
      _
    $region39: #{tpu_custom_call.1} parent=1 // pred_check_branch
      %1017 = sbr.rel (0) target = $region41
    $region40: #{tpu_custom_call.1} parent=1 // pred_region
      %1018 = dma.done [#allocation4], 256
    $region41: #{tpu_custom_call.1} parent=1 // pred_fallthru
      _
    %1019 = vsyncpa [#allocation3], 1
    %1020 = vsyncpa [#allocation6], 1
    %1021 = vsyncpa [#allocation4], 1

</llo_original>
